<compile_context>
chip_gen: v7x
topology: tpu7x:2x2x1
jax: 0.10.0
libtpu: 0.0.40
codegen_flags: <defaults>
</compile_context>

<pallas_src>
import functools

import jax
import jax.numpy as jnp
from jax.experimental import pallas as pl
from jax.experimental.pallas import tpu as pltpu


def _silu(z):
    # SiLU(z) = z * sigmoid(z); logistic lowers to EUP transcendentals.
    return z * jax.lax.logistic(z)


def _round_up(x, m):
    return ((x + m - 1) // m) * m


def _choose_batch_tile(b_pad, max_batch_tile):
    """Largest 128-multiple divisor of b_pad that fits max_batch_tile and, when
    b_pad >= 256, leaves at least 2 grid steps (so the batch axis shards across
    both TensorCores on v7x)."""
    blocks = b_pad // 128
    max_blocks = max(1, max_batch_tile // 128)
    if blocks <= 1:
        return 128
    target = max(1, min(max_blocks, blocks // 2))
    for t in range(target, 0, -1):
        if blocks % t == 0:
            return t * 128
    return 128


def ebm_kernel(out_dim, xT_ref, w1_ref, w23_ref, w4_ref, b_ref, o_ref):
    """One batch tile of the full 4-layer MLP.

    xT_ref : [in_dim, Bt]   (compute dtype, lane-dense on batch)
    w1_ref : [H, in_dim]    w23_ref: [2, H, H]   w4_ref: [out_dim, H]
    b_ref  : [H, 4] f32     (columns: b1, b2, b3, b4-padded)
    o_ref  : [out_dim, Bt]  f32
    """
    cdt = w1_ref.dtype
    b1 = b_ref[:, 0:1]
    b2 = b_ref[:, 1:2]
    b3 = b_ref[:, 2:3]
    b4 = b_ref[:out_dim, 3:4]

    # Layer 1 (single K=in_dim push; concat already fused in the wrapper).
    h = _silu(jnp.dot(w1_ref[...], xT_ref[...],
                      preferred_element_type=jnp.float32) + b1)          # [H, Bt] f32
    # Layers 2 & 3.
    h = _silu(jnp.dot(w23_ref[0], h.astype(cdt),
                      preferred_element_type=jnp.float32) + b2)          # [H, Bt] f32
    h = _silu(jnp.dot(w23_ref[1], h.astype(cdt),
                      preferred_element_type=jnp.float32) + b3)          # [H, Bt] f32
    # Layer 4.
    h = jnp.dot(w4_ref[...], h.astype(cdt),
                preferred_element_type=jnp.float32) + b4                 # [O, Bt] f32
    o_ref[...] = h.astype(o_ref.dtype)


def prepare_params(params, compute_dtype=jnp.bfloat16):
    """One-time repack of torch-layout params (W [out,in], b [out,1]) into the
    kernel layout. Do this once, outside the hot loop."""
    (w1, b1), (w2, b2), (w3, b3), (w4, b4) = params
    hidden = w1.shape[0]
    out_dim = w4.shape[0]
    w1k = jnp.asarray(w1, compute_dtype)
    w23k = jnp.stack([jnp.asarray(w2), jnp.asarray(w3)]).astype(compute_dtype)
    w4k = jnp.asarray(w4, compute_dtype)
    b4p = jnp.zeros((hidden, 1), jnp.float32).at[:out_dim, :].set(
        jnp.asarray(b4, jnp.float32))
    bk = jnp.concatenate([jnp.asarray(b1, jnp.float32),
                          jnp.asarray(b2, jnp.float32),
                          jnp.asarray(b3, jnp.float32),
                          b4p], axis=1)                                   # [H, 4]
    return (w1k, w23k, w4k, bk)


@functools.partial(jax.jit, static_argnames=("max_batch_tile",))
def ebm_forward(act, obs, prepared, *, max_batch_tile=8192):
    """Pallas implementation of EBM.forward(act, obs) -> [B, output_size]."""
    w1, w23, w4, b = prepared
    compute_dtype = w1.dtype
    hidden, in_dim = w1.shape
    out_dim = w4.shape[0]

    act = act.astype(jnp.float32)
    obs = obs.astype(jnp.float32)
    B = act.shape[0]

    # Fused concat (torch.cat((act, obs), -1)) done once here; tiny.
    x = jnp.concatenate([act, obs], axis=-1)                              # [B, in_dim]
    B_pad = _round_up(B, 128)
    if B_pad != B:
        x = jnp.pad(x, ((0, B_pad - B), (0, 0)))
    xT = x.T.astype(compute_dtype)                                        # [in_dim, B_pad]

    batch_tile = _choose_batch_tile(B_pad, max_batch_tile)
    grid = (B_pad // batch_tile,)

    def xmap(i):          # batch-tiled input/output: tile along the lane axis
        return (0, i)

    def pmap2(i):         # resident 2-D params
        return (0, 0)

    def pmap3(i):         # resident 3-D params
        return (0, 0, 0)

    flops = 2 * B_pad * (in_dim * hidden + 2 * hidden * hidden + hidden * out_dim)
    transcendentals = 3 * B_pad * hidden
    itemsize = jnp.dtype(compute_dtype).itemsize
    param_bytes = itemsize * (w1.size + w23.size + w4.size) + 4 * b.size
    bytes_accessed = itemsize * B_pad * in_dim + 4 * B_pad * out_dim + param_bytes

    out_t = pl.pallas_call(
        functools.partial(ebm_kernel, out_dim),
        out_shape=jax.ShapeDtypeStruct((out_dim, B_pad), jnp.float32),
        grid_spec=pl.GridSpec(
            grid=grid,
            in_specs=[
                pl.BlockSpec((in_dim, batch_tile), xmap),
                pl.BlockSpec(w1.shape, pmap2),
                pl.BlockSpec(w23.shape, pmap3),
                pl.BlockSpec(w4.shape, pmap2),
                pl.BlockSpec(b.shape, pmap2),
            ],
            out_specs=pl.BlockSpec((out_dim, batch_tile), xmap),
        ),
        compiler_params=pltpu.CompilerParams(
            dimension_semantics=("parallel",),
            vmem_limit_bytes=32 * 1024 * 1024),
        cost_estimate=pl.CostEstimate(
            flops=flops,
            transcendentals=transcendentals,
            bytes_accessed=int(bytes_accessed)),
    )(xT, w1, w23, w4, b)

    # Back to the torch-shaped result [B, out_dim] (tiny layout plumbing).
    return out_t[:, :B].T


def init_params(key, input_size, hidden_size, output_size):
    """Deterministic synthetic params in torch layout: W [out, in], b [out, 1]."""
    dims = [(input_size, hidden_size),
            (hidden_size, hidden_size),
            (hidden_size, hidden_size),
            (hidden_size, output_size)]
    params = []
    for i, (din, dout) in enumerate(dims):
        kw, kb = jax.random.split(jax.random.fold_in(key, i))
        bound = 1.0 / jnp.sqrt(din)
        w = jax.random.uniform(kw, (dout, din), jnp.float32, -bound, bound)
        b = jax.random.uniform(kb, (dout, 1), jnp.float32, -bound, bound)
        params.append((w, b))
    return params


def ebm_reference(act, obs, params):
    x = jnp.concatenate([act.astype(jnp.float32), obs.astype(jnp.float32)], axis=-1)
    (w1, b1), (w2, b2), (w3, b3), (w4, b4) = params
    h = _silu(x @ w1.T + b1[:, 0])
    h = _silu(h @ w2.T + b2[:, 0])
    h = _silu(h @ w3.T + b3[:, 0])
    return h @ w4.T + b4[:, 0]


if __name__ == "__main__":
    key = jax.random.PRNGKey(0)

    batch = 128
    act_dim = 4
    obs_dim = 4
    input_size = act_dim + obs_dim
    hidden_size = 32
    output_size = 2

    k_act, k_obs, k_par = jax.random.split(key, 3)
    act = jax.random.normal(k_act, (batch, act_dim), jnp.float32)
    obs = jax.random.normal(k_obs, (batch, obs_dim), jnp.float32)
    params = init_params(k_par, input_size, hidden_size, output_size)

    prep_bf16 = prepare_params(params, jnp.bfloat16)   # default fast path
    prep_f32 = prepare_params(params, jnp.float32)     # accuracy path

    ref = ebm_reference(act, obs, params)

    # f32 path: tight tolerance.
    out_f32 = jax.block_until_ready(ebm_forward(act, obs, prep_f32))
    assert out_f32.shape == (batch, output_size)
    assert jnp.allclose(out_f32, ref, atol=1e-5, rtol=1e-5)

    # bf16-weight path: relaxed tolerance (bf16 operands, f32 accumulation).
    out_bf16 = jax.block_until_ready(ebm_forward(act, obs, prep_bf16))
    assert out_bf16.shape == (batch, output_size)
    assert jnp.allclose(out_bf16, ref, atol=5e-2, rtol=5e-2)

    # Non-divisible batch (pads only to the next multiple of 128).
    act2 = jax.random.normal(k_act, (37, act_dim), jnp.float32)
    obs2 = jax.random.normal(k_obs, (37, obs_dim), jnp.float32)
    out2 = jax.block_until_ready(ebm_forward(act2, obs2, prep_f32))
    ref2 = ebm_reference(act2, obs2, params)
    assert out2.shape == (37, output_size)
    assert jnp.allclose(out2, ref2, atol=1e-5, rtol=1e-5)

    # Larger batch: exercises the multi-step grid (>= 2 tiles for v7x megacore).
    act3 = jax.random.normal(k_act, (512, act_dim), jnp.float32)
    obs3 = jax.random.normal(k_obs, (512, obs_dim), jnp.float32)
    out3 = jax.block_until_ready(ebm_forward(act3, obs3, prep_f32))
    ref3 = ebm_reference(act3, obs3, params)
    assert out3.shape == (512, output_size)
    assert jnp.allclose(out3, ref3, atol=1e-5, rtol=1e-5)

    print("KERNEL_OK")
</pallas_src>

<mosaic_0001>
module attributes {stable_mosaic.version = 11 : i64} {
  func.func @ebm_kernel(%arg0: i32, %arg1: memref<8x128xf32, #tpu.memory_space<vmem>>, %arg2: memref<32x8xf32, #tpu.memory_space<vmem>>, %arg3: memref<2x32x32xf32, #tpu.memory_space<vmem>>, %arg4: memref<2x32xf32, #tpu.memory_space<vmem>>, %arg5: memref<32x4xf32, #tpu.memory_space<vmem>>, %arg6: memref<2x128xf32, #tpu.memory_space<vmem>>) attributes {dimension_semantics = [#tpu.dimension_semantics<parallel>], iteration_bounds = array<i64: 1>, scalar_prefetch = 0 : i64, scratch_operands = 0 : i64, tpu.core_type = #tpu.core_type<tc>, window_params = [{transform_indices = @transform_0, window_bounds = array<i64: 8, 128>}, {pipeline_mode = #tpu.pipeline_mode<synchronous>, transform_indices = @transform_1, window_bounds = array<i64: 32, 8>}, {pipeline_mode = #tpu.pipeline_mode<synchronous>, transform_indices = @transform_2, window_bounds = array<i64: 2, 32, 32>}, {pipeline_mode = #tpu.pipeline_mode<synchronous>, transform_indices = @transform_3, window_bounds = array<i64: 2, 32>}, {pipeline_mode = #tpu.pipeline_mode<synchronous>, transform_indices = @transform_4, window_bounds = array<i64: 32, 4>}, {transform_indices = @transform_5, window_bounds = array<i64: 2, 128>}]} {
    %c0 = arith.constant 0 : index
    %c0_0 = arith.constant 0 : index
    %0 = vector.load %arg5[%c0, %c0_0] : memref<32x4xf32, #tpu.memory_space<vmem>>, vector<32x1xf32>
    %c0_1 = arith.constant 0 : index
    %c1 = arith.constant 1 : index
    %1 = vector.load %arg5[%c0_1, %c1] : memref<32x4xf32, #tpu.memory_space<vmem>>, vector<32x1xf32>
    %c0_2 = arith.constant 0 : index
    %c2 = arith.constant 2 : index
    %2 = vector.load %arg5[%c0_2, %c2] : memref<32x4xf32, #tpu.memory_space<vmem>>, vector<32x1xf32>
    %c0_3 = arith.constant 0 : index
    %c3 = arith.constant 3 : index
    %3 = vector.load %arg5[%c0_3, %c3] : memref<32x4xf32, #tpu.memory_space<vmem>>, vector<2x1xf32>
    %c0_4 = arith.constant 0 : index
    %c0_5 = arith.constant 0 : index
    %4 = vector.load %arg2[%c0_4, %c0_5] : memref<32x8xf32, #tpu.memory_space<vmem>>, vector<32x8xf32>
    %c0_6 = arith.constant 0 : index
    %c0_7 = arith.constant 0 : index
    %5 = vector.load %arg1[%c0_6, %c0_7] : memref<8x128xf32, #tpu.memory_space<vmem>>, vector<8x128xf32>
    %cst = arith.constant dense<0.000000e+00> : vector<32x128xf32>
    %6 = tpu.matmul %4, %5, %cst {dimension_numbers = #tpu.dot_dimension_numbers<[1], [0], [0], [1], [0, 0, 1, 1], [], []>} : vector<32x8xf32>, vector<8x128xf32>, vector<32x128xf32> -> vector<32x128xf32>
    %7 = vector.broadcast %0 : vector<32x1xf32> to vector<32x128xf32>
    %8 = arith.addf %6, %7 : vector<32x128xf32>
    %9 = arith.negf %8 : vector<32x128xf32>
    %10 = math.exp %9 : vector<32x128xf32>
    %cst_8 = arith.constant 1.000000e+00 : f32
    %11 = vector.broadcast %cst_8 : f32 to vector<32x128xf32>
    %12 = arith.addf %11, %10 : vector<32x128xf32>
    %13 = arith.divf %11, %12 : vector<32x128xf32>
    %14 = arith.mulf %8, %13 : vector<32x128xf32>
    %c0_9 = arith.constant 0 : index
    %c0_10 = arith.constant 0 : index
    %c0_11 = arith.constant 0 : index
    %15 = vector.load %arg3[%c0_9, %c0_10, %c0_11] : memref<2x32x32xf32, #tpu.memory_space<vmem>>, vector<1x32x32xf32>
    %16 = vector.shape_cast %15 : vector<1x32x32xf32> to vector<32x32xf32>
    %cst_12 = arith.constant dense<0.000000e+00> : vector<32x128xf32>
    %17 = tpu.matmul %16, %14, %cst_12 {dimension_numbers = #tpu.dot_dimension_numbers<[1], [0], [0], [1], [0, 0, 1, 1], [], []>} : vector<32x32xf32>, vector<32x128xf32>, vector<32x128xf32> -> vector<32x128xf32>
    %18 = vector.broadcast %1 : vector<32x1xf32> to vector<32x128xf32>
    %19 = arith.addf %17, %18 : vector<32x128xf32>
    %20 = arith.negf %19 : vector<32x128xf32>
    %21 = math.exp %20 : vector<32x128xf32>
    %cst_13 = arith.constant 1.000000e+00 : f32
    %22 = vector.broadcast %cst_13 : f32 to vector<32x128xf32>
    %23 = arith.addf %22, %21 : vector<32x128xf32>
    %24 = arith.divf %22, %23 : vector<32x128xf32>
    %25 = arith.mulf %19, %24 : vector<32x128xf32>
    %c1_14 = arith.constant 1 : index
    %c0_15 = arith.constant 0 : index
    %c0_16 = arith.constant 0 : index
    %26 = vector.load %arg3[%c1_14, %c0_15, %c0_16] : memref<2x32x32xf32, #tpu.memory_space<vmem>>, vector<1x32x32xf32>
    %27 = vector.shape_cast %26 : vector<1x32x32xf32> to vector<32x32xf32>
    %cst_17 = arith.constant dense<0.000000e+00> : vector<32x128xf32>
    %28 = tpu.matmul %27, %25, %cst_17 {dimension_numbers = #tpu.dot_dimension_numbers<[1], [0], [0], [1], [0, 0, 1, 1], [], []>} : vector<32x32xf32>, vector<32x128xf32>, vector<32x128xf32> -> vector<32x128xf32>
    %29 = vector.broadcast %2 : vector<32x1xf32> to vector<32x128xf32>
    %30 = arith.addf %28, %29 : vector<32x128xf32>
    %31 = arith.negf %30 : vector<32x128xf32>
    %32 = math.exp %31 : vector<32x128xf32>
    %cst_18 = arith.constant 1.000000e+00 : f32
    %33 = vector.broadcast %cst_18 : f32 to vector<32x128xf32>
    %34 = arith.addf %33, %32 : vector<32x128xf32>
    %35 = arith.divf %33, %34 : vector<32x128xf32>
    %36 = arith.mulf %30, %35 : vector<32x128xf32>
    %c0_19 = arith.constant 0 : index
    %c0_20 = arith.constant 0 : index
    %37 = vector.load %arg4[%c0_19, %c0_20] : memref<2x32xf32, #tpu.memory_space<vmem>>, vector<2x32xf32>
    %cst_21 = arith.constant dense<0.000000e+00> : vector<2x128xf32>
    %38 = tpu.matmul %37, %36, %cst_21 {dimension_numbers = #tpu.dot_dimension_numbers<[1], [0], [0], [1], [0, 0, 1, 1], [], []>} : vector<2x32xf32>, vector<32x128xf32>, vector<2x128xf32> -> vector<2x128xf32>
    %39 = vector.broadcast %3 : vector<2x1xf32> to vector<2x128xf32>
    %40 = arith.addf %38, %39 : vector<2x128xf32>
    %c0_22 = arith.constant 0 : index
    %c0_23 = arith.constant 0 : index
    %41 = vector.load %arg6[%c0_22, %c0_23] : memref<2x128xf32, #tpu.memory_space<vmem>>, vector<2x128xf32>
    tpu.vector_store %arg6[%c0_22, %c0_23], %40 {strides = array<i32>} : memref<2x128xf32, #tpu.memory_space<vmem>>, vector<2x128xf32>,
    return
  }
  func.func @transform_0(%arg0: i32) -> (i32, i32) {
    %c0_i32 = arith.constant 0 : i32
    %c0_i32_0 = arith.constant 0 : i32
    return %c0_i32, %arg0 : i32, i32
  }
  func.func @transform_1(%arg0: i32) -> (i32, i32) {
    %c0_i32 = arith.constant 0 : i32
    %c0_i32_0 = arith.constant 0 : i32
    %c0_i32_1 = arith.constant 0 : i32
    return %c0_i32, %c0_i32_0 : i32, i32
  }
  func.func @transform_2(%arg0: i32) -> (i32, i32, i32) {
    %c0_i32 = arith.constant 0 : i32
    %c0_i32_0 = arith.constant 0 : i32
    %c0_i32_1 = arith.constant 0 : i32
    %c0_i32_2 = arith.constant 0 : i32
    return %c0_i32, %c0_i32_0, %c0_i32_1 : i32, i32, i32
  }
  func.func @transform_3(%arg0: i32) -> (i32, i32) {
    %c0_i32 = arith.constant 0 : i32
    %c0_i32_0 = arith.constant 0 : i32
    %c0_i32_1 = arith.constant 0 : i32
    return %c0_i32, %c0_i32_0 : i32, i32
  }
  func.func @transform_4(%arg0: i32) -> (i32, i32) {
    %c0_i32 = arith.constant 0 : i32
    %c0_i32_0 = arith.constant 0 : i32
    %c0_i32_1 = arith.constant 0 : i32
    return %c0_i32, %c0_i32_0 : i32, i32
  }
  func.func @transform_5(%arg0: i32) -> (i32, i32) {
    %c0_i32 = arith.constant 0 : i32
    %c0_i32_0 = arith.constant 0 : i32
    return %c0_i32, %arg0 : i32, i32
  }
}

</mosaic_0001>

<llo_original>
// kernel: ebm_forward.1
$region0: #{ebm_forward.1}
  #allocation0 [shape = 'u32[]', space=smem, size = 0x4, offset = 0x4, fixed_abs, tag = 'smem constant byte address 0x4 - core index']
  #allocation1 [shape = 'u32[144,128]{1,0:T(1,128)}', space=vmem, size = 0x12000, scoped, tag = 'internal scratch']
  %s0 = inlined_call_operand.vmem [shape: f32[8,128], index: 0, kind: input, shape index: {}]
  %s1 = inlined_call_operand.vmem [shape: f32[32,8], index: 1, kind: input, shape index: {}]
  %s2 = inlined_call_operand.vmem [shape: f32[2,32,32], index: 2, kind: input, shape index: {}]
  %s3 = inlined_call_operand.vmem [shape: f32[2,32], index: 3, kind: input, shape index: {}]
  %s4 = inlined_call_operand.vmem [shape: f32[32,4], index: 4, kind: input, shape index: {}]
  %s5 = inlined_call_operand.hbm [shape: f32[2,128], index: 5, kind: output, shape index: {}]
  %s6 = sld [smem:[#allocation0]]
  $region30: #{ebm_forward.1} parent=0
    _
  %s8 = ssub.s32 1, %s6
  %s9 = scalar_select 0, %s8, %s6
  $region1: #{ebm_forward.1} parent=0
    #allocation2 [shape = 'u8[1024]{0}', space=vmem, size = 0x400, scoped, tag = 'output window, operand 0, single buffered']
    #allocation3 [shape = 's32[1]{0}', space=sflag, size = 0x4, scoped, tag = 'scoped memory for ebm_forward.1']
    %10 = vsyncpa [#allocation3], 0
    // Predicated region
    $region2: #{ebm_forward.1} parent=1 // pred_check
      _
    $region3: #{ebm_forward.1} parent=1 // pred_check_branch
      %12 = sbr.rel (0) target = $region5
    $region4: #{ebm_forward.1} parent=1 // pred_region
      _
    $region5: #{ebm_forward.1} parent=1 // pred_fallthru
      _
    // Predicated region
    $region6: #{ebm_forward.1} parent=1 // pred_check
      _
    $region7: #{ebm_forward.1} parent=1 // pred_check_branch
      %14 = sbr.rel (0) target = $region9
    $region8: #{ebm_forward.1} parent=1 // pred_region
      _
    $region9: #{ebm_forward.1} parent=1 // pred_fallthru
      _
    // Predicated region
    $region10: #{ebm_forward.1} parent=1 // pred_check
      _
    $region11: #{ebm_forward.1} parent=1 // pred_check_branch
      %16 = sbr.rel (0) target = $region13
    $region12: #{ebm_forward.1} parent=1 // pred_region
      _
    $region13: #{ebm_forward.1} parent=1 // pred_fallthru
      _
    // Predicated region
    $region14: #{ebm_forward.1} parent=1 // pred_check
      _
    $region15: #{ebm_forward.1} parent=1 // pred_check_branch
      %18 = sbr.rel (0) target = $region17
    $region16: #{ebm_forward.1} parent=1 // pred_region
      _
    $region17: #{ebm_forward.1} parent=1 // pred_fallthru
      _
    // Predicated region
    $region18: #{ebm_forward.1} parent=1 // pred_check
      _
    $region19: #{ebm_forward.1} parent=1 // pred_check_branch
      %20 = sbr.rel (0) target = $region21
    $region20: #{ebm_forward.1} parent=1 // pred_region
      _
    $region21: #{ebm_forward.1} parent=1 // pred_fallthru
      _
    %v21 = vld [vmem:[%s4] sm:$0xff]
    %v22 = vld [vmem:[%s4 + $0x8] sm:$0xff]
    %v23 = vld [vmem:[%s4 + $0x10] sm:$0xff]
    %v24 = vld [vmem:[%s4 + $0x18] sm:$0xff]
    %v25 = vld [vmem:[%s4] sm:$0x3]
    %v26 = vld [vmem:[%s1] sm:$0xff]
    %v27 = vld [vmem:[%s1 + $0x8] sm:$0xff]
    %v28 = vld [vmem:[%s1 + $0x10] sm:$0xff]
    %v29 = vld [vmem:[%s1 + $0x18] sm:$0xff]
    %v30 = vld [vmem:[%s0] sm:$0xff]
    %32 = vset.pattern.permute.xlu0 0
    %33 = vperm.xlu0 %32, %v21
    %v34 = vpop.permute.xlu0 %33
    %37 = vset.pattern.permute.xlu0 0
    %38 = vperm.xlu0 %37, %v22
    %v39 = vpop.permute.xlu0 %38
    %42 = vset.pattern.permute.xlu0 0
    %43 = vperm.xlu0 %42, %v23
    %v44 = vpop.permute.xlu0 %43
    %47 = vset.pattern.permute.xlu0 0
    %48 = vperm.xlu0 %47, %v24
    %v49 = vpop.permute.xlu0 %48
    %vm51 = vcmask 64512
    %v53 = vsel %vm51, %v26, 0
    %v56 = vsel %vm51, %v27, 0
    %v59 = vsel %vm51, %v28, 0
    %v62 = vsel %vm51, %v29, 0
    %64 = vmatprep.subr.mxu0 0.0
    %65 = vmatpush1.msra.mxu0 %v30
    %66 = vmatprep.subr.mxu0 0.0
    %67 = vmatpush1.msra.mxu0 0.0
    %68 = vmatprep.subr.mxu0 0.0
    %69 = vmatpush1.msra.mxu0 0.0
    %70 = vmatprep.subr.mxu0 0.0
    %71 = vmatpush1.msra.mxu0 0.0
    %72 = vmatprep.subr.mxu0 0.0
    %73 = vmatpush1.msra.mxu0 0.0
    %74 = vmatprep.subr.mxu0 0.0
    %75 = vmatpush1.msra.mxu0 0.0
    %76 = vmatprep.subr.mxu0 0.0
    %77 = vmatpush1.msra.mxu0 0.0
    %78 = vmatprep.subr.mxu0 0.0
    %79 = vmatpush1.msra.mxu0 0.0
    %80 = vmatprep.subr.mxu0 0.0
    %81 = vmatpush1.msra.mxu0 0.0
    %82 = vmatprep.subr.mxu0 0.0
    %83 = vmatpush1.msra.mxu0 0.0
    %84 = vmatprep.subr.mxu0 0.0
    %85 = vmatpush1.msra.mxu0 0.0
    %86 = vmatprep.subr.mxu0 0.0
    %87 = vmatpush1.msra.mxu0 0.0
    %88 = vmatprep.subr.mxu0 0.0
    %89 = vmatpush1.msra.mxu0 0.0
    %90 = vmatprep.subr.mxu0 0.0
    %91 = vmatpush1.msra.mxu0 0.0
    %92 = vmatprep.subr.mxu0 0.0
    %93 = vmatpush1.msra.mxu0 0.0
    %94 = vmatprep.subr.mxu0 0.0
    %95 = vmatpush1.msra.mxu0 0.0
    %96 = vmatprep.subr.mxu0 0.0
    %97 = vmatpush1.msra.mxu0 0.0
    %98 = vmatprep.subr.mxu0 0.0
    %99 = vmatpush1.msra.mxu0 0.0
    %100 = vmatprep.subr.mxu0 0.0
    %101 = vmatpush1.msra.mxu0 0.0
    %102 = vmatprep.subr.mxu0 0.0
    %103 = vmatpush1.msra.mxu0 0.0
    %104 = vmatprep.subr.mxu0 0.0
    %105 = vmatpush1.msra.mxu0 0.0
    %106 = vmatprep.subr.mxu0 0.0
    %107 = vmatpush1.msra.mxu0 0.0
    %108 = vmatprep.subr.mxu0 0.0
    %109 = vmatpush1.msra.mxu0 0.0
    %110 = vmatprep.subr.mxu0 0.0
    %111 = vmatpush1.msra.mxu0 0.0
    %112 = vmatprep.subr.mxu0 0.0
    %113 = vmatpush1.msra.mxu0 0.0
    %114 = vmatprep.subr.mxu0 0.0
    %115 = vmatpush1.msra.mxu0 0.0
    %116 = vmatprep.subr.mxu0 0.0
    %117 = vmatpush1.msra.mxu0 0.0
    %118 = vmatprep.subr.mxu0 0.0
    %119 = vmatpush1.msra.mxu0 0.0
    %120 = vmatprep.subr.mxu0 0.0
    %121 = vmatpush1.msra.mxu0 0.0
    %122 = vmatprep.subr.mxu0 0.0
    %123 = vmatpush1.msra.mxu0 0.0
    %124 = vmatprep.subr.mxu0 0.0
    %125 = vmatpush1.msra.mxu0 0.0
    %126 = vmatprep.subr.mxu0 0.0
    %127 = vmatpush1.msra.mxu0 0.0
    %128 = vmatprep.mubr.f32.mxu0 0.0
    %129 = vmatmul.mubr.f32.gmra.mrb[0].mxu0 %v53
    %v130 = vpop.f32.mrb[0].mxu0
    %v131 = vadd.f32 %v34, %v130
    %v132 = vpop.f32.mrb[0].mxu0
    %133 = vmatprep.mubr.f32.mxu0 0.0
    %134 = vmatmul.mubr.f32.gmra.mrb[0].mxu0 %v56
    %v135 = vpop.f32.mrb[0].mxu0
    %v136 = vadd.f32 %v39, %v135
    %v137 = vpop.f32.mrb[0].mxu0
    %138 = vmatprep.mubr.f32.mxu0 0.0
    %139 = vmatmul.mubr.f32.gmra.mrb[0].mxu0 %v59
    %v140 = vpop.f32.mrb[0].mxu0
    %v141 = vadd.f32 %v44, %v140
    %v142 = vpop.f32.mrb[0].mxu0
    %143 = vmatprep.mubr.f32.mxu0 0.0
    %144 = vmatmul.mubr.f32.gmra.mrb[0].mxu0 %v62
    %v145 = vpop.f32.mrb[0].mxu0
    %v146 = vadd.f32 %v49, %v145
    %v147 = vpop.f32.mrb[0].mxu0
    %148 = vdwg.mxu0
    %v149 = vxor.u32 %v131, 2147483648
    %v150 = vxor.u32 %v136, 2147483648
    %v151 = vxor.u32 %v141, 2147483648
    %v152 = vxor.u32 %v146, 2147483648
    %v153 = vmul.f32 %v149, 1.442695
    %v154 = vpow.pop %v153
    %v155 = vmul.f32 %v150, 1.442695
    %v156 = vpow.pop %v155
    %v157 = vmul.f32 %v151, 1.442695
    %v158 = vpow.pop %v157
    %v159 = vmul.f32 %v152, 1.442695
    %v160 = vpow.pop %v159
    %v161 = vadd.f32 %v154, 1.0
    %v162 = vadd.f32 %v156, 1.0
    %v163 = vadd.f32 %v158, 1.0
    %v164 = vadd.f32 %v160, 1.0
    %v165 = vrcp.pop %v161
    %v166 = vmul.f32 1.0, %v165
    %v167 = vrcp.pop %v162
    %v168 = vmul.f32 1.0, %v167
    %v169 = vrcp.pop %v163
    %v170 = vmul.f32 1.0, %v169
    %v171 = vrcp.pop %v164
    %v172 = vmul.f32 1.0, %v171
    %v173 = vmul.f32 %v131, %v166
    %v174 = vmul.f32 %v136, %v168
    %v175 = vmul.f32 %v141, %v170
    %v176 = vmul.f32 %v146, %v172
    %v177 = vld [vmem:[%s2] sm:$0xff]
    %v178 = vld [vmem:[%s2 + $0x8] sm:$0xff]
    %v179 = vld [vmem:[%s2 + $0x10] sm:$0xff]
    %v180 = vld [vmem:[%s2 + $0x18] sm:$0xff]
    %181 = vset.pattern.permute.xlu0 1
    %182 = vperm.xlu0 %181, %v21
    %v183 = vpop.permute.xlu0 %182
    %185 = vset.pattern.permute.xlu0 1
    %186 = vperm.xlu0 %185, %v22
    %v187 = vpop.permute.xlu0 %186
    %189 = vset.pattern.permute.xlu0 1
    %190 = vperm.xlu0 %189, %v23
    %v191 = vpop.permute.xlu0 %190
    %193 = vset.pattern.permute.xlu0 1
    %194 = vperm.xlu0 %193, %v24
    %v195 = vpop.permute.xlu0 %194
    %vm197 = vcmask 261120
    %v199 = vsel %vm197, %v177, 0
    %v202 = vsel %vm197, %v178, 0
    %v205 = vsel %vm197, %v179, 0
    %v208 = vsel %vm197, %v180, 0
    %210 = vmatprep.subr.mxu0 0.0
    %211 = vmatpush1.msra.mxu0 %v173
    %212 = vmatprep.subr.mxu0 0.0
    %213 = vmatpush1.msra.mxu0 %v174
    %214 = vmatprep.subr.mxu0 0.0
    %215 = vmatpush1.msra.mxu0 %v175
    %216 = vmatprep.subr.mxu0 0.0
    %217 = vmatpush1.msra.mxu0 %v176
    %218 = vmatprep.subr.mxu0 0.0
    %219 = vmatpush1.msra.mxu0 0.0
    %220 = vmatprep.subr.mxu0 0.0
    %221 = vmatpush1.msra.mxu0 0.0
    %222 = vmatprep.subr.mxu0 0.0
    %223 = vmatpush1.msra.mxu0 0.0
    %224 = vmatprep.subr.mxu0 0.0
    %225 = vmatpush1.msra.mxu0 0.0
    %226 = vmatprep.subr.mxu0 0.0
    %227 = vmatpush1.msra.mxu0 0.0
    %228 = vmatprep.subr.mxu0 0.0
    %229 = vmatpush1.msra.mxu0 0.0
    %230 = vmatprep.subr.mxu0 0.0
    %231 = vmatpush1.msra.mxu0 0.0
    %232 = vmatprep.subr.mxu0 0.0
    %233 = vmatpush1.msra.mxu0 0.0
    %234 = vmatprep.subr.mxu0 0.0
    %235 = vmatpush1.msra.mxu0 0.0
    %236 = vmatprep.subr.mxu0 0.0
    %237 = vmatpush1.msra.mxu0 0.0
    %238 = vmatprep.subr.mxu0 0.0
    %239 = vmatpush1.msra.mxu0 0.0
    %240 = vmatprep.subr.mxu0 0.0
    %241 = vmatpush1.msra.mxu0 0.0
    %242 = vmatprep.subr.mxu0 0.0
    %243 = vmatpush1.msra.mxu0 0.0
    %244 = vmatprep.subr.mxu0 0.0
    %245 = vmatpush1.msra.mxu0 0.0
    %246 = vmatprep.subr.mxu0 0.0
    %247 = vmatpush1.msra.mxu0 0.0
    %248 = vmatprep.subr.mxu0 0.0
    %249 = vmatpush1.msra.mxu0 0.0
    %250 = vmatprep.subr.mxu0 0.0
    %251 = vmatpush1.msra.mxu0 0.0
    %252 = vmatprep.subr.mxu0 0.0
    %253 = vmatpush1.msra.mxu0 0.0
    %254 = vmatprep.subr.mxu0 0.0
    %255 = vmatpush1.msra.mxu0 0.0
    %256 = vmatprep.subr.mxu0 0.0
    %257 = vmatpush1.msra.mxu0 0.0
    %258 = vmatprep.subr.mxu0 0.0
    %259 = vmatpush1.msra.mxu0 0.0
    %260 = vmatprep.subr.mxu0 0.0
    %261 = vmatpush1.msra.mxu0 0.0
    %262 = vmatprep.subr.mxu0 0.0
    %263 = vmatpush1.msra.mxu0 0.0
    %264 = vmatprep.subr.mxu0 0.0
    %265 = vmatpush1.msra.mxu0 0.0
    %266 = vmatprep.subr.mxu0 0.0
    %267 = vmatpush1.msra.mxu0 0.0
    %268 = vmatprep.subr.mxu0 0.0
    %269 = vmatpush1.msra.mxu0 0.0
    %270 = vmatprep.subr.mxu0 0.0
    %271 = vmatpush1.msra.mxu0 0.0
    %272 = vmatprep.subr.mxu0 0.0
    %273 = vmatpush1.msra.mxu0 0.0
    %274 = vmatprep.mubr.f32.mxu0 0.0
    %275 = vmatmul.mubr.f32.gmra.mrb[0].mxu0 %v199
    %v276 = vpop.f32.mrb[0].mxu0
    %v277 = vadd.f32 %v183, %v276
    %v278 = vpop.f32.mrb[0].mxu0
    %279 = vmatprep.mubr.f32.mxu0 0.0
    %280 = vmatmul.mubr.f32.gmra.mrb[0].mxu0 %v202
    %v281 = vpop.f32.mrb[0].mxu0
    %v282 = vadd.f32 %v187, %v281
    %v283 = vpop.f32.mrb[0].mxu0
    %284 = vmatprep.mubr.f32.mxu0 0.0
    %285 = vmatmul.mubr.f32.gmra.mrb[0].mxu0 %v205
    %v286 = vpop.f32.mrb[0].mxu0
    %v287 = vadd.f32 %v191, %v286
    %v288 = vpop.f32.mrb[0].mxu0
    %289 = vmatprep.mubr.f32.mxu0 0.0
    %290 = vmatmul.mubr.f32.gmra.mrb[0].mxu0 %v208
    %v291 = vpop.f32.mrb[0].mxu0
    %v292 = vadd.f32 %v195, %v291
    %v293 = vpop.f32.mrb[0].mxu0
    %294 = vdwg.mxu0
    %v295 = vxor.u32 %v277, 2147483648
    %v296 = vxor.u32 %v282, 2147483648
    %v297 = vxor.u32 %v287, 2147483648
    %v298 = vxor.u32 %v292, 2147483648
    %v299 = vmul.f32 %v295, 1.442695
    %v300 = vpow.pop %v299
    %v301 = vmul.f32 %v296, 1.442695
    %v302 = vpow.pop %v301
    %v303 = vmul.f32 %v297, 1.442695
    %v304 = vpow.pop %v303
    %v305 = vmul.f32 %v298, 1.442695
    %v306 = vpow.pop %v305
    %v307 = vadd.f32 %v300, 1.0
    %v308 = vadd.f32 %v302, 1.0
    %v309 = vadd.f32 %v304, 1.0
    %v310 = vadd.f32 %v306, 1.0
    %v311 = vrcp.pop %v307
    %v312 = vmul.f32 1.0, %v311
    %v313 = vrcp.pop %v308
    %v314 = vmul.f32 1.0, %v313
    %v315 = vrcp.pop %v309
    %v316 = vmul.f32 1.0, %v315
    %v317 = vrcp.pop %v310
    %v318 = vmul.f32 1.0, %v317
    %v319 = vmul.f32 %v277, %v312
    %v320 = vmul.f32 %v282, %v314
    %v321 = vmul.f32 %v287, %v316
    %v322 = vmul.f32 %v292, %v318
    %s323 = scalar_lea.vmem %s2, 32
    %v324 = vld [vmem:[%s323] sm:$0xff]
    %v325 = vld [vmem:[%s323 + $0x8] sm:$0xff]
    %v326 = vld [vmem:[%s323 + $0x10] sm:$0xff]
    %v327 = vld [vmem:[%s323 + $0x18] sm:$0xff]
    %328 = vset.pattern.permute.xlu0 2
    %329 = vperm.xlu0 %328, %v21
    %v330 = vpop.permute.xlu0 %329
    %332 = vset.pattern.permute.xlu0 2
    %333 = vperm.xlu0 %332, %v22
    %v334 = vpop.permute.xlu0 %333
    %336 = vset.pattern.permute.xlu0 2
    %337 = vperm.xlu0 %336, %v23
    %v338 = vpop.permute.xlu0 %337
    %340 = vset.pattern.permute.xlu0 2
    %341 = vperm.xlu0 %340, %v24
    %v342 = vpop.permute.xlu0 %341
    %v345 = vsel %vm197, %v324, 0
    %v348 = vsel %vm197, %v325, 0
    %v351 = vsel %vm197, %v326, 0
    %v354 = vsel %vm197, %v327, 0
    %356 = vmatprep.subr.mxu0 0.0
    %357 = vmatpush1.msra.mxu0 %v319
    %358 = vmatprep.subr.mxu0 0.0
    %359 = vmatpush1.msra.mxu0 %v320
    %360 = vmatprep.subr.mxu0 0.0
    %361 = vmatpush1.msra.mxu0 %v321
    %362 = vmatprep.subr.mxu0 0.0
    %363 = vmatpush1.msra.mxu0 %v322
    %364 = vmatprep.subr.mxu0 0.0
    %365 = vmatpush1.msra.mxu0 0.0
    %366 = vmatprep.subr.mxu0 0.0
    %367 = vmatpush1.msra.mxu0 0.0
    %368 = vmatprep.subr.mxu0 0.0
    %369 = vmatpush1.msra.mxu0 0.0
    %370 = vmatprep.subr.mxu0 0.0
    %371 = vmatpush1.msra.mxu0 0.0
    %372 = vmatprep.subr.mxu0 0.0
    %373 = vmatpush1.msra.mxu0 0.0
    %374 = vmatprep.subr.mxu0 0.0
    %375 = vmatpush1.msra.mxu0 0.0
    %376 = vmatprep.subr.mxu0 0.0
    %377 = vmatpush1.msra.mxu0 0.0
    %378 = vmatprep.subr.mxu0 0.0
    %379 = vmatpush1.msra.mxu0 0.0
    %380 = vmatprep.subr.mxu0 0.0
    %381 = vmatpush1.msra.mxu0 0.0
    %382 = vmatprep.subr.mxu0 0.0
    %383 = vmatpush1.msra.mxu0 0.0
    %384 = vmatprep.subr.mxu0 0.0
    %385 = vmatpush1.msra.mxu0 0.0
    %386 = vmatprep.subr.mxu0 0.0
    %387 = vmatpush1.msra.mxu0 0.0
    %388 = vmatprep.subr.mxu0 0.0
    %389 = vmatpush1.msra.mxu0 0.0
    %390 = vmatprep.subr.mxu0 0.0
    %391 = vmatpush1.msra.mxu0 0.0
    %392 = vmatprep.subr.mxu0 0.0
    %393 = vmatpush1.msra.mxu0 0.0
    %394 = vmatprep.subr.mxu0 0.0
    %395 = vmatpush1.msra.mxu0 0.0
    %396 = vmatprep.subr.mxu0 0.0
    %397 = vmatpush1.msra.mxu0 0.0
    %398 = vmatprep.subr.mxu0 0.0
    %399 = vmatpush1.msra.mxu0 0.0
    %400 = vmatprep.subr.mxu0 0.0
    %401 = vmatpush1.msra.mxu0 0.0
    %402 = vmatprep.subr.mxu0 0.0
    %403 = vmatpush1.msra.mxu0 0.0
    %404 = vmatprep.subr.mxu0 0.0
    %405 = vmatpush1.msra.mxu0 0.0
    %406 = vmatprep.subr.mxu0 0.0
    %407 = vmatpush1.msra.mxu0 0.0
    %408 = vmatprep.subr.mxu0 0.0
    %409 = vmatpush1.msra.mxu0 0.0
    %410 = vmatprep.subr.mxu0 0.0
    %411 = vmatpush1.msra.mxu0 0.0
    %412 = vmatprep.subr.mxu0 0.0
    %413 = vmatpush1.msra.mxu0 0.0
    %414 = vmatprep.subr.mxu0 0.0
    %415 = vmatpush1.msra.mxu0 0.0
    %416 = vmatprep.subr.mxu0 0.0
    %417 = vmatpush1.msra.mxu0 0.0
    %418 = vmatprep.subr.mxu0 0.0
    %419 = vmatpush1.msra.mxu0 0.0
    %420 = vmatprep.mubr.f32.mxu0 0.0
    %421 = vmatmul.mubr.f32.gmra.mrb[0].mxu0 %v345
    %v422 = vpop.f32.mrb[0].mxu0
    %v423 = vadd.f32 %v330, %v422
    %v424 = vpop.f32.mrb[0].mxu0
    %425 = vmatprep.mubr.f32.mxu0 0.0
    %426 = vmatmul.mubr.f32.gmra.mrb[0].mxu0 %v348
    %v427 = vpop.f32.mrb[0].mxu0
    %v428 = vadd.f32 %v334, %v427
    %v429 = vpop.f32.mrb[0].mxu0
    %430 = vmatprep.mubr.f32.mxu0 0.0
    %431 = vmatmul.mubr.f32.gmra.mrb[0].mxu0 %v351
    %v432 = vpop.f32.mrb[0].mxu0
    %v433 = vadd.f32 %v338, %v432
    %v434 = vpop.f32.mrb[0].mxu0
    %435 = vmatprep.mubr.f32.mxu0 0.0
    %436 = vmatmul.mubr.f32.gmra.mrb[0].mxu0 %v354
    %v437 = vpop.f32.mrb[0].mxu0
    %v438 = vadd.f32 %v342, %v437
    %v439 = vpop.f32.mrb[0].mxu0
    %440 = vdwg.mxu0
    %v441 = vxor.u32 %v423, 2147483648
    %v442 = vxor.u32 %v428, 2147483648
    %v443 = vxor.u32 %v433, 2147483648
    %v444 = vxor.u32 %v438, 2147483648
    %v445 = vmul.f32 %v441, 1.442695
    %v446 = vpow.pop %v445
    %v447 = vmul.f32 %v442, 1.442695
    %v448 = vpow.pop %v447
    %v449 = vmul.f32 %v443, 1.442695
    %v450 = vpow.pop %v449
    %v451 = vmul.f32 %v444, 1.442695
    %v452 = vpow.pop %v451
    %v453 = vadd.f32 %v446, 1.0
    %v454 = vadd.f32 %v448, 1.0
    %v455 = vadd.f32 %v450, 1.0
    %v456 = vadd.f32 %v452, 1.0
    %v457 = vrcp.pop %v453
    %v458 = vmul.f32 1.0, %v457
    %v459 = vrcp.pop %v454
    %v460 = vmul.f32 1.0, %v459
    %v461 = vrcp.pop %v455
    %v462 = vmul.f32 1.0, %v461
    %v463 = vrcp.pop %v456
    %v464 = vmul.f32 1.0, %v463
    %v465 = vmul.f32 %v423, %v458
    %v466 = vmul.f32 %v428, %v460
    %v467 = vmul.f32 %v433, %v462
    %v468 = vmul.f32 %v438, %v464
    %v469 = vld [vmem:[%s3] sm:$0x3]
    %471 = vset.pattern.permute.xlu0 3
    %472 = vperm.xlu0 %471, %v25
    %v473 = vpop.permute.xlu0 %472
    %v476 = vsel %vm197, %v469, 0
    %478 = vmatprep.subr.mxu0 0.0
    %479 = vmatpush1.msra.mxu0 %v465
    %480 = vmatprep.subr.mxu0 0.0
    %481 = vmatpush1.msra.mxu0 %v466
    %482 = vmatprep.subr.mxu0 0.0
    %483 = vmatpush1.msra.mxu0 %v467
    %484 = vmatprep.subr.mxu0 0.0
    %485 = vmatpush1.msra.mxu0 %v468
    %486 = vmatprep.subr.mxu0 0.0
    %487 = vmatpush1.msra.mxu0 0.0
    %488 = vmatprep.subr.mxu0 0.0
    %489 = vmatpush1.msra.mxu0 0.0
    %490 = vmatprep.subr.mxu0 0.0
    %491 = vmatpush1.msra.mxu0 0.0
    %492 = vmatprep.subr.mxu0 0.0
    %493 = vmatpush1.msra.mxu0 0.0
    %494 = vmatprep.subr.mxu0 0.0
    %495 = vmatpush1.msra.mxu0 0.0
    %496 = vmatprep.subr.mxu0 0.0
    %497 = vmatpush1.msra.mxu0 0.0
    %498 = vmatprep.subr.mxu0 0.0
    %499 = vmatpush1.msra.mxu0 0.0
    %500 = vmatprep.subr.mxu0 0.0
    %501 = vmatpush1.msra.mxu0 0.0
    %502 = vmatprep.subr.mxu0 0.0
    %503 = vmatpush1.msra.mxu0 0.0
    %504 = vmatprep.subr.mxu0 0.0
    %505 = vmatpush1.msra.mxu0 0.0
    %506 = vmatprep.subr.mxu0 0.0
    %507 = vmatpush1.msra.mxu0 0.0
    %508 = vmatprep.subr.mxu0 0.0
    %509 = vmatpush1.msra.mxu0 0.0
    %510 = vmatprep.subr.mxu0 0.0
    %511 = vmatpush1.msra.mxu0 0.0
    %512 = vmatprep.subr.mxu0 0.0
    %513 = vmatpush1.msra.mxu0 0.0
    %514 = vmatprep.subr.mxu0 0.0
    %515 = vmatpush1.msra.mxu0 0.0
    %516 = vmatprep.subr.mxu0 0.0
    %517 = vmatpush1.msra.mxu0 0.0
    %518 = vmatprep.subr.mxu0 0.0
    %519 = vmatpush1.msra.mxu0 0.0
    %520 = vmatprep.subr.mxu0 0.0
    %521 = vmatpush1.msra.mxu0 0.0
    %522 = vmatprep.subr.mxu0 0.0
    %523 = vmatpush1.msra.mxu0 0.0
    %524 = vmatprep.subr.mxu0 0.0
    %525 = vmatpush1.msra.mxu0 0.0
    %526 = vmatprep.subr.mxu0 0.0
    %527 = vmatpush1.msra.mxu0 0.0
    %528 = vmatprep.subr.mxu0 0.0
    %529 = vmatpush1.msra.mxu0 0.0
    %530 = vmatprep.subr.mxu0 0.0
    %531 = vmatpush1.msra.mxu0 0.0
    %532 = vmatprep.subr.mxu0 0.0
    %533 = vmatpush1.msra.mxu0 0.0
    %534 = vmatprep.subr.mxu0 0.0
    %535 = vmatpush1.msra.mxu0 0.0
    %536 = vmatprep.subr.mxu0 0.0
    %537 = vmatpush1.msra.mxu0 0.0
    %538 = vmatprep.subr.mxu0 0.0
    %539 = vmatpush1.msra.mxu0 0.0
    %540 = vmatprep.subr.mxu0 0.0
    %541 = vmatpush1.msra.mxu0 0.0
    %542 = vmatprep.mubr.f32.mxu0 0.0
    %543 = vmatmul.mubr.f32.gmra.mrb[0].mxu0 %v476
    %v544 = vpop.f32.mrb[0].mxu0
    %v545 = vadd.f32 %v473, %v544
    %v546 = vpop.f32.mrb[0].mxu0
    %547 = vdwg.mxu0
    %548 = vst [vmem:[#allocation2] sm:$0x3] %v545
    // Predicated region
    $region22: #{ebm_forward.1} parent=1 // pred_check
      _
    $region23: #{ebm_forward.1} parent=1 // pred_check_branch
      %550 = sbr.rel (0) target = $region25
    $region24: #{ebm_forward.1} parent=1 // pred_region
      %s552 = ssub.s32 32, 32
      %553 = vsyncadd [#allocation3], %s552
      %s555 = sshll.u32 [#allocation2], 4
      %s556 = int_to_ptr.vmem [resolvable:$true] %s555
      %558 = dma.vmem_to_hbm [thread:$0]  %s556, 32, %s5, [#allocation3]
    $region25: #{ebm_forward.1} parent=1 // pred_fallthru
      _
    // Predicated region
    $region26: #{ebm_forward.1} parent=1 // pred_check
      _
    $region27: #{ebm_forward.1} parent=1 // pred_check_branch
      %560 = sbr.rel (0) target = $region29
    $region28: #{ebm_forward.1} parent=1 // pred_region
      %561 = dma.done [#allocation3], 32
    $region29: #{ebm_forward.1} parent=1 // pred_fallthru
      _
    %562 = vsyncpa [#allocation3], 1

</llo_original>
